<compile_context>
chip_gen: v6e
topology: v6e:2x2x1
jax: 0.10.0
libtpu: 0.0.40
codegen_flags: <defaults>
</compile_context>

<pallas_src>
import functools

import jax
import jax.numpy as jnp
from jax import lax
from jax.experimental import pallas as pl
from jax.experimental.pallas import tpu as pltpu


def _round_up(x: int, m: int) -> int:
    return ((x + m - 1) // m) * m


def _gather_block_kernel(idx_ref, table_ref, out_ref, *, block_b: int):
    # idx_ref  : SMEM (n_pad,) int32 -- scalar-prefetched lookup indices
    # table_ref: VMEM (region, D)    -- full table, resident across all steps
    # out_ref  : VMEM (block_b, D)   -- one lane/sublane-dense output tile
    base = pl.program_id(0) * block_b

    def body(b, carry):
        row = idx_ref[base + b]          # scalar read from SMEM
        out_ref[b, :] = table_ref[row, :]  # VMEM row copy (dynamic sublane index)
        return carry

    lax.fori_loop(0, block_b, body, 0, unroll=block_b <= 32)


@functools.partial(jax.jit, static_argnames=("block_b",))
def embedding_lookup(table: jax.Array, indices: jax.Array, *, block_b: int = 256):
    """Gather rows of `table` ((region, D)) at `indices` ((N,) int) -> (N, D)."""
    region, d = table.shape
    n = indices.shape[0]
    itemsize = jnp.dtype(table.dtype).itemsize
    sublane = {4: 8, 2: 16, 1: 32}.get(itemsize, 8)

    # Rows per grid step: multiple of the sublane count, no bigger than needed.
    bb = min(_round_up(block_b, sublane), _round_up(n, sublane))
    n_pad = _round_up(n, bb)

    # nn.Embedding raises on out-of-range indices; clamp instead of reading OOB.
    idx = jnp.clip(indices.astype(jnp.int32), 0, region - 1)
    idx = jnp.pad(idx, (0, n_pad - n))  # pad with row 0; padded rows are dropped

    kernel = functools.partial(_gather_block_kernel, block_b=bb)
    out = pl.pallas_call(
        kernel,
        out_shape=jax.ShapeDtypeStruct((n_pad, d), table.dtype),
        grid_spec=pltpu.PrefetchScalarGridSpec(
            num_scalar_prefetch=1,
            grid=(n_pad // bb,),
            in_specs=[
                # Whole table as one VMEM block; constant block index (0, 0)
                # => fetched once, re-DMA skipped on later grid steps.
                pl.BlockSpec((region, d), lambda i, idx_ref: (0, 0)),
            ],
            out_specs=pl.BlockSpec((bb, d), lambda i, idx_ref: (i, 0)),
        ),
        compiler_params=pltpu.CompilerParams(
            # Independent output blocks -> shardable across TensorCores (v7x).
            dimension_semantics=("parallel",),
            # Explicit scoped-VMEM budget; plenty for table + double-buffered
            # output tiles on every generation (v7x physical VMEM is 64 MiB).
            vmem_limit_bytes=32 * 1024 * 1024,
        ),
        cost_estimate=pl.CostEstimate(
            flops=0,
            transcendentals=0,
            bytes_accessed=(region * d + 2 * n_pad * d) * itemsize,
        ),
    )(idx, table)
    return out[:n]


def weight_embedding_forward(table: jax.Array, weight, *, use_pallas: bool = False):
    """Pallas/JAX equivalent of weight_embedding.forward(weight) -> (embedding_dim,)."""
    # torch.tensor([weight]) -> int32 index (note: non-integer weights truncate).
    idx = jnp.asarray(weight, dtype=jnp.int32).reshape(())
    if use_pallas:
        # Route through the batched Pallas gather (pads a single index to one block).
        return embedding_lookup(table, idx.reshape(1))[0]
    # Single-row lookup: an XLA dynamic-slice beats a Pallas launch (perf review).
    region = table.shape[0]
    idx = jnp.clip(idx, 0, region - 1)
    return lax.dynamic_index_in_dim(table, idx, axis=0, keepdims=False)


if __name__ == "__main__":
    # Module config: nn.Embedding(region, embedding_dim).
    region = 16
    embedding_dim = 128  # lane-dense (multiple of 128)

    key = jax.random.PRNGKey(0)
    table = jax.random.normal(key, (region, embedding_dim), dtype=jnp.float32)

    # --- Single-index forward (original module semantics, XLA fast path) -----
    weight = 5
    out = jax.block_until_ready(weight_embedding_forward(table, weight))
    assert out.shape == (embedding_dim,)
    assert jnp.allclose(out, table[weight]), "single-lookup (XLA path) mismatch"

    # Same single index, routed through the Pallas gather kernel.
    out_p = jax.block_until_ready(
        weight_embedding_forward(table, jnp.int32(weight), use_pallas=True)
    )
    assert jnp.allclose(out_p, table[weight]), "single-lookup (Pallas path) mismatch"

    # --- Batched lookup through the Pallas kernel (primary perf path) --------
    idx_key = jax.random.PRNGKey(1)
    indices = jax.random.randint(idx_key, (37,), 0, region, dtype=jnp.int32)
    batched = jax.block_until_ready(embedding_lookup(table, indices))
    assert batched.shape == (indices.shape[0], embedding_dim)
    assert jnp.allclose(batched, table[indices]), "batched lookup mismatch"

    # Multi-block grid (grid length 3) to exercise the block pipeline / megacore.
    indices2 = jnp.tile(jnp.arange(16, dtype=jnp.int32), 3)  # (48,)
    batched2 = jax.block_until_ready(
        embedding_lookup(table, indices2, block_b=16)
    )
    assert jnp.allclose(batched2, table[indices2]), "multi-block lookup mismatch"

    print("KERNEL_OK")
</pallas_src>

<mosaic_0001>
module attributes {stable_mosaic.version = 11 : i64} {
  func.func @_gather_block_kernel(%arg0: i32, %arg1: memref<8xi32, #tpu.memory_space<smem>>, %arg2: memref<16x128xf32, #tpu.memory_space<vmem>>, %arg3: memref<8x128xf32, #tpu.memory_space<vmem>>) attributes {dimension_semantics = [#tpu.dimension_semantics<parallel>], iteration_bounds = array<i64: 1>, scalar_prefetch = 1 : i64, scratch_operands = 0 : i64, tpu.core_type = #tpu.core_type<tc>, window_params = [{pipeline_mode = #tpu.pipeline_mode<synchronous>, transform_indices = @transform_0, window_bounds = array<i64: 16, 128>}, {transform_indices = @transform_1, window_bounds = array<i64: 8, 128>}]} {
    %c8_i32 = arith.constant 8 : i32
    %0 = arith.muli %arg0, %c8_i32 : i32
    %c0_i32 = arith.constant 0 : i32
    %1 = arith.addi %0, %c0_i32 : i32
    %2 = arith.index_cast %1 : i32 to index
    %3 = memref.load %arg1[%2] : memref<8xi32, #tpu.memory_space<smem>>
    %4 = arith.index_cast %3 : i32 to index
    %c0 = arith.constant 0 : index
    %5 = vector.load %arg2[%4, %c0] : memref<16x128xf32, #tpu.memory_space<vmem>>, vector<1x128xf32>
    %6 = vector.shape_cast %5 : vector<1x128xf32> to vector<128xf32>
    %7 = arith.index_cast %c0_i32 : i32 to index
    %c0_0 = arith.constant 0 : index
    %8 = vector.load %arg3[%7, %c0_0] : memref<8x128xf32, #tpu.memory_space<vmem>>, vector<1x128xf32>
    %9 = vector.shape_cast %8 : vector<1x128xf32> to vector<128xf32>
    %10 = vector.shape_cast %6 : vector<128xf32> to vector<1x128xf32>
    tpu.vector_store %arg3[%7, %c0_0], %10 {strides = array<i32>} : memref<8x128xf32, #tpu.memory_space<vmem>>, vector<1x128xf32>,
    %c1_i32 = arith.constant 1 : i32
    %11 = arith.addi %0, %c1_i32 : i32
    %12 = arith.index_cast %11 : i32 to index
    %13 = memref.load %arg1[%12] : memref<8xi32, #tpu.memory_space<smem>>
    %14 = arith.index_cast %13 : i32 to index
    %c0_1 = arith.constant 0 : index
    %15 = vector.load %arg2[%14, %c0_1] : memref<16x128xf32, #tpu.memory_space<vmem>>, vector<1x128xf32>
    %16 = vector.shape_cast %15 : vector<1x128xf32> to vector<128xf32>
    %17 = arith.index_cast %c1_i32 : i32 to index
    %c0_2 = arith.constant 0 : index
    %18 = vector.load %arg3[%17, %c0_2] : memref<8x128xf32, #tpu.memory_space<vmem>>, vector<1x128xf32>
    %19 = vector.shape_cast %18 : vector<1x128xf32> to vector<128xf32>
    %20 = vector.shape_cast %16 : vector<128xf32> to vector<1x128xf32>
    tpu.vector_store %arg3[%17, %c0_2], %20 {strides = array<i32>} : memref<8x128xf32, #tpu.memory_space<vmem>>, vector<1x128xf32>,
    %c2_i32 = arith.constant 2 : i32
    %21 = arith.addi %0, %c2_i32 : i32
    %22 = arith.index_cast %21 : i32 to index
    %23 = memref.load %arg1[%22] : memref<8xi32, #tpu.memory_space<smem>>
    %24 = arith.index_cast %23 : i32 to index
    %c0_3 = arith.constant 0 : index
    %25 = vector.load %arg2[%24, %c0_3] : memref<16x128xf32, #tpu.memory_space<vmem>>, vector<1x128xf32>
    %26 = vector.shape_cast %25 : vector<1x128xf32> to vector<128xf32>
    %27 = arith.index_cast %c2_i32 : i32 to index
    %c0_4 = arith.constant 0 : index
    %28 = vector.load %arg3[%27, %c0_4] : memref<8x128xf32, #tpu.memory_space<vmem>>, vector<1x128xf32>
    %29 = vector.shape_cast %28 : vector<1x128xf32> to vector<128xf32>
    %30 = vector.shape_cast %26 : vector<128xf32> to vector<1x128xf32>
    tpu.vector_store %arg3[%27, %c0_4], %30 {strides = array<i32>} : memref<8x128xf32, #tpu.memory_space<vmem>>, vector<1x128xf32>,
    %c3_i32 = arith.constant 3 : i32
    %31 = arith.addi %0, %c3_i32 : i32
    %32 = arith.index_cast %31 : i32 to index
    %33 = memref.load %arg1[%32] : memref<8xi32, #tpu.memory_space<smem>>
    %34 = arith.index_cast %33 : i32 to index
    %c0_5 = arith.constant 0 : index
    %35 = vector.load %arg2[%34, %c0_5] : memref<16x128xf32, #tpu.memory_space<vmem>>, vector<1x128xf32>
    %36 = vector.shape_cast %35 : vector<1x128xf32> to vector<128xf32>
    %37 = arith.index_cast %c3_i32 : i32 to index
    %c0_6 = arith.constant 0 : index
    %38 = vector.load %arg3[%37, %c0_6] : memref<8x128xf32, #tpu.memory_space<vmem>>, vector<1x128xf32>
    %39 = vector.shape_cast %38 : vector<1x128xf32> to vector<128xf32>
    %40 = vector.shape_cast %36 : vector<128xf32> to vector<1x128xf32>
    tpu.vector_store %arg3[%37, %c0_6], %40 {strides = array<i32>} : memref<8x128xf32, #tpu.memory_space<vmem>>, vector<1x128xf32>,
    %c4_i32 = arith.constant 4 : i32
    %41 = arith.addi %0, %c4_i32 : i32
    %42 = arith.index_cast %41 : i32 to index
    %43 = memref.load %arg1[%42] : memref<8xi32, #tpu.memory_space<smem>>
    %44 = arith.index_cast %43 : i32 to index
    %c0_7 = arith.constant 0 : index
    %45 = vector.load %arg2[%44, %c0_7] : memref<16x128xf32, #tpu.memory_space<vmem>>, vector<1x128xf32>
    %46 = vector.shape_cast %45 : vector<1x128xf32> to vector<128xf32>
    %47 = arith.index_cast %c4_i32 : i32 to index
    %c0_8 = arith.constant 0 : index
    %48 = vector.load %arg3[%47, %c0_8] : memref<8x128xf32, #tpu.memory_space<vmem>>, vector<1x128xf32>
    %49 = vector.shape_cast %48 : vector<1x128xf32> to vector<128xf32>
    %50 = vector.shape_cast %46 : vector<128xf32> to vector<1x128xf32>
    tpu.vector_store %arg3[%47, %c0_8], %50 {strides = array<i32>} : memref<8x128xf32, #tpu.memory_space<vmem>>, vector<1x128xf32>,
    %c5_i32 = arith.constant 5 : i32
    %51 = arith.addi %0, %c5_i32 : i32
    %52 = arith.index_cast %51 : i32 to index
    %53 = memref.load %arg1[%52] : memref<8xi32, #tpu.memory_space<smem>>
    %54 = arith.index_cast %53 : i32 to index
    %c0_9 = arith.constant 0 : index
    %55 = vector.load %arg2[%54, %c0_9] : memref<16x128xf32, #tpu.memory_space<vmem>>, vector<1x128xf32>
    %56 = vector.shape_cast %55 : vector<1x128xf32> to vector<128xf32>
    %57 = arith.index_cast %c5_i32 : i32 to index
    %c0_10 = arith.constant 0 : index
    %58 = vector.load %arg3[%57, %c0_10] : memref<8x128xf32, #tpu.memory_space<vmem>>, vector<1x128xf32>
    %59 = vector.shape_cast %58 : vector<1x128xf32> to vector<128xf32>
    %60 = vector.shape_cast %56 : vector<128xf32> to vector<1x128xf32>
    tpu.vector_store %arg3[%57, %c0_10], %60 {strides = array<i32>} : memref<8x128xf32, #tpu.memory_space<vmem>>, vector<1x128xf32>,
    %c6_i32 = arith.constant 6 : i32
    %61 = arith.addi %0, %c6_i32 : i32
    %62 = arith.index_cast %61 : i32 to index
    %63 = memref.load %arg1[%62] : memref<8xi32, #tpu.memory_space<smem>>
    %64 = arith.index_cast %63 : i32 to index
    %c0_11 = arith.constant 0 : index
    %65 = vector.load %arg2[%64, %c0_11] : memref<16x128xf32, #tpu.memory_space<vmem>>, vector<1x128xf32>
    %66 = vector.shape_cast %65 : vector<1x128xf32> to vector<128xf32>
    %67 = arith.index_cast %c6_i32 : i32 to index
    %c0_12 = arith.constant 0 : index
    %68 = vector.load %arg3[%67, %c0_12] : memref<8x128xf32, #tpu.memory_space<vmem>>, vector<1x128xf32>
    %69 = vector.shape_cast %68 : vector<1x128xf32> to vector<128xf32>
    %70 = vector.shape_cast %66 : vector<128xf32> to vector<1x128xf32>
    tpu.vector_store %arg3[%67, %c0_12], %70 {strides = array<i32>} : memref<8x128xf32, #tpu.memory_space<vmem>>, vector<1x128xf32>,
    %c7_i32 = arith.constant 7 : i32
    %71 = arith.addi %0, %c7_i32 : i32
    %72 = arith.index_cast %71 : i32 to index
    %73 = memref.load %arg1[%72] : memref<8xi32, #tpu.memory_space<smem>>
    %74 = arith.index_cast %73 : i32 to index
    %c0_13 = arith.constant 0 : index
    %75 = vector.load %arg2[%74, %c0_13] : memref<16x128xf32, #tpu.memory_space<vmem>>, vector<1x128xf32>
    %76 = vector.shape_cast %75 : vector<1x128xf32> to vector<128xf32>
    %77 = arith.index_cast %c7_i32 : i32 to index
    %c0_14 = arith.constant 0 : index
    %78 = vector.load %arg3[%77, %c0_14] : memref<8x128xf32, #tpu.memory_space<vmem>>, vector<1x128xf32>
    %79 = vector.shape_cast %78 : vector<1x128xf32> to vector<128xf32>
    %80 = vector.shape_cast %76 : vector<128xf32> to vector<1x128xf32>
    tpu.vector_store %arg3[%77, %c0_14], %80 {strides = array<i32>} : memref<8x128xf32, #tpu.memory_space<vmem>>, vector<1x128xf32>,
    %c8_i32_15 = arith.constant 8 : i32
    return
  }
  func.func @transform_0(%arg0: i32, %arg1: memref<8xi32, #tpu.memory_space<smem>>) -> (i32, i32) {
    %c0_i32 = arith.constant 0 : i32
    %c0_i32_0 = arith.constant 0 : i32
    %c0_i32_1 = arith.constant 0 : i32
    return %c0_i32, %c0_i32_0 : i32, i32
  }
  func.func @transform_1(%arg0: i32, %arg1: memref<8xi32, #tpu.memory_space<smem>>) -> (i32, i32) {
    %c0_i32 = arith.constant 0 : i32
    %c0_i32_0 = arith.constant 0 : i32
    return %arg0, %c0_i32 : i32, i32
  }
}

</mosaic_0001>

<llo_original>
// kernel: embedding_lookup.1
$region0: #{embedding_lookup.1}
  #allocation0 [shape = 'u32[]', space=smem, size = 0x4, offset = 0x4, fixed_abs, tag = 'smem constant byte address 0x4 - core index']
  #allocation1 [shape = 'u32[144,128]{1,0:T(1,128)}', space=vmem, size = 0x12000, scoped, tag = 'internal scratch']
  #allocation2 [shape = 's32[1]{0}', space=sflag, size = 0x4, scoped, tag = 'scoped memory for embedding_lookup.1']
  #allocation3 [shape = 'u8[512]{0}', space=smem, size = 0x200, scoped, tag = 'prefetched SMEM operand 0']
  %s0 = inlined_call_operand.vmem [shape: s32[8], index: 0, kind: input, shape index: {}]
  %s1 = inlined_call_operand.hbm [shape: f32[16,128], index: 1, kind: input, shape index: {}]
  %s2 = inlined_call_operand.vmem [shape: f32[8,128], index: 2, kind: output, shape index: {}]
  %s3 = sld [smem:[#allocation0]]
  $region18: #{embedding_lookup.1} parent=0
    _
  %s5 = ssub.s32 1, %s3
  %s6 = scalar_select 0, %s5, %s3
  %s7 = sshll.u32 %s0, 4
  %s8 = int_to_ptr.vmem [resolvable:$true] %s7
  %10 = dma.vmem_to_smem %s8, 16, [#allocation3], [#allocation2]
  %11 = dma.done [#allocation2], 16
  %12 = sfence
  $region1: #{embedding_lookup.1} parent=0
    #allocation4 [shape = 'u8[8192]{0}', space=vmem, size = 0x2000, scoped, tag = 'input window, operand 1, single buffered']
    #allocation5 [shape = 's32[1]{0}', space=sflag, size = 0x4, scoped, tag = 'scoped memory for embedding_lookup.1']
    %13 = vsyncpa [#allocation5], 0
    // Predicated region
    $region2: #{embedding_lookup.1} parent=1 // pred_check
      _
    $region3: #{embedding_lookup.1} parent=1 // pred_check_branch
      %15 = sbr.rel (0) target = $region5
    $region4: #{embedding_lookup.1} parent=1 // pred_region
      %s17 = ssub.s32 256, 256
      %18 = vsyncadd [#allocation5], %s17
      %s19 = sshll.u32 [#allocation4], 4
      %s20 = int_to_ptr.vmem [resolvable:$true] %s19
      %25 = dma.hbm_to_vmem [thread:$0]  %s1, 256, %s20, [#allocation5], 128, 128, 8
    $region5: #{embedding_lookup.1} parent=1 // pred_fallthru
      _
    // Predicated region
    $region6: #{embedding_lookup.1} parent=1 // pred_check
      _
    $region7: #{embedding_lookup.1} parent=1 // pred_check_branch
      %27 = sbr.rel (0) target = $region9
    $region8: #{embedding_lookup.1} parent=1 // pred_region
      %28 = dma.done [#allocation5], 256
    $region9: #{embedding_lookup.1} parent=1 // pred_fallthru
      _
    %s29 = smul.u32 0, 8
    %s30 = sld [smem:[#allocation3 + %s29]]
    %s31 = scalar_lea.vmem [#allocation4], %s30
    %v32 = vld [vmem:[%s31] sm:$0x1]
    %33 = vst [vmem:[%s2] sm:$0x1] %v32
    %s34 = sadd.s32 %s29, 1
    %s35 = sld [smem:[#allocation3 + %s34]]
    %s36 = scalar_lea.vmem [#allocation4], %s35
    %v37 = vld [vmem:[%s36] sm:$0x1]
    %38 = vst [vmem:[%s2 + $0x1] sm:$0x1] %v37
    %s39 = sadd.s32 %s29, 2
    %s40 = sld [smem:[#allocation3 + %s39]]
    %s41 = scalar_lea.vmem [#allocation4], %s40
    %v42 = vld [vmem:[%s41] sm:$0x1]
    %43 = vst [vmem:[%s2 + $0x2] sm:$0x1] %v42
    %s44 = sadd.s32 %s29, 3
    %s45 = sld [smem:[#allocation3 + %s44]]
    %s46 = scalar_lea.vmem [#allocation4], %s45
    %v47 = vld [vmem:[%s46] sm:$0x1]
    %48 = vst [vmem:[%s2 + $0x3] sm:$0x1] %v47
    %s49 = sadd.s32 %s29, 4
    %s50 = sld [smem:[#allocation3 + %s49]]
    %s51 = scalar_lea.vmem [#allocation4], %s50
    %v52 = vld [vmem:[%s51] sm:$0x1]
    %53 = vst [vmem:[%s2 + $0x4] sm:$0x1] %v52
    %s54 = sadd.s32 %s29, 5
    %s55 = sld [smem:[#allocation3 + %s54]]
    %s56 = scalar_lea.vmem [#allocation4], %s55
    %v57 = vld [vmem:[%s56] sm:$0x1]
    %58 = vst [vmem:[%s2 + $0x5] sm:$0x1] %v57
    %s59 = sadd.s32 %s29, 6
    %s60 = sld [smem:[#allocation3 + %s59]]
    %s61 = scalar_lea.vmem [#allocation4], %s60
    %v62 = vld [vmem:[%s61] sm:$0x1]
    %63 = vst [vmem:[%s2 + $0x6] sm:$0x1] %v62
    %s64 = sadd.s32 %s29, 7
    %s65 = sld [smem:[#allocation3 + %s64]]
    %s66 = scalar_lea.vmem [#allocation4], %s65
    %v67 = vld [vmem:[%s66] sm:$0x1]
    %68 = vst [vmem:[%s2 + $0x7] sm:$0x1] %v67
    // Predicated region
    $region10: #{embedding_lookup.1} parent=1 // pred_check
      _
    $region11: #{embedding_lookup.1} parent=1 // pred_check_branch
      %70 = sbr.rel (0) target = $region13
    $region12: #{embedding_lookup.1} parent=1 // pred_region
      _
    $region13: #{embedding_lookup.1} parent=1 // pred_fallthru
      _
    // Predicated region
    $region14: #{embedding_lookup.1} parent=1 // pred_check
      _
    $region15: #{embedding_lookup.1} parent=1 // pred_check_branch
      %72 = sbr.rel (0) target = $region17
    $region16: #{embedding_lookup.1} parent=1 // pred_region
      _
    $region17: #{embedding_lookup.1} parent=1 // pred_fallthru
      _
    %73 = vsyncpa [#allocation5], 1

</llo_original>
